<compile_context>
chip_gen: v7x
topology: tpu7x:2x2x1
jax: 0.10.0
libtpu: 0.0.40
codegen_flags: <defaults>
</compile_context>

<pallas_src>
import jax
import jax.numpy as jnp
from jax.experimental import pallas as pl
from jax.experimental.pallas import tpu as pltpu

_LANE = 128     # vreg lane width (fast axis)
_SUBLANE = 8    # f32 sublane count


# -----------------------------------------------------------------------------
# Config (mirrors the fields Voxel.__init__ reads from cfg)
# -----------------------------------------------------------------------------
class VoxelCfg:
    type = "regression"
    Nx = 8
    Ny = 8
    N_layers = 4
    N_freq = 16
    real_min_eps = 1.0
    real_max_eps = 20.0
    imag_min_eps = 0.0
    imag_max_eps = 1.0


# -----------------------------------------------------------------------------
# Pallas kernel: affine rescale of raw uniform samples into eps ranges.
# raw_ref / out_ref: (2, rows, 128) float32 — plane 0 = real, plane 1 = imag.
# -----------------------------------------------------------------------------
def _make_voxel_kernel(real_min, real_max, imag_min, imag_max):
    r_scale = float(real_max - real_min)
    r_shift = float(real_min)
    i_scale = float(imag_max - imag_min)
    i_shift = float(imag_min)

    def voxel_kernel(raw_ref, out_ref):
        # Pure VPU elementwise work on unpadded (8,128)-aligned tiles:
        # matches `init_w.real *= (max-min); init_w.real += min` (and imag).
        out_ref[0] = raw_ref[0] * r_scale + r_shift
        out_ref[1] = raw_ref[1] * i_scale + i_shift

    return voxel_kernel


class VoxelPallas:
    """JAX/Pallas equivalent of the PyTorch Voxel module."""

    def __init__(self, cfg, key):
        assert cfg.type == "regression", (
            "VoxelGrid is currently only implemented for regression."
        )
        self.cfg = cfg
        shape = (cfg.Nx, cfg.Ny, cfg.N_layers, cfg.N_freq)
        total = cfg.Nx * cfg.Ny * cfg.N_layers * cfg.N_freq

        k_real, k_imag = jax.random.split(key)
        # raw uniform samples in [0, 1), analogous to torch.rand(..., dtype=cfloat)
        self._real_raw = jax.random.uniform(k_real, shape, dtype=jnp.float32)
        self._imag_raw = jax.random.uniform(k_imag, shape, dtype=jnp.float32)

        # --- lane-dense slab layout -----------------------------------------
        # Flatten each plane and view it as (rows, 128) with rows % 8 == 0.
        # For the default cfg this is exactly (32, 128): no padding, unmasked
        # vld/vst, one (8,128) tile every 8 rows.
        tile_elems = _SUBLANE * _LANE
        padded = -(-total // tile_elems) * tile_elems
        rows = padded // _LANE

        def to_slab(x):
            flat = x.reshape(-1)
            if padded != total:
                flat = jnp.pad(flat, (0, padded - total))
            return flat.reshape(rows, _LANE)

        raw = jnp.stack([to_slab(self._real_raw), to_slab(self._imag_raw)], axis=0)

        kernel = _make_voxel_kernel(
            cfg.real_min_eps, cfg.real_max_eps, cfg.imag_min_eps, cfg.imag_max_eps
        )

        vmem_spec = pl.BlockSpec(memory_space=pltpu.MemorySpace.VMEM)
        scaled = pl.pallas_call(
            kernel,
            out_shape=jax.ShapeDtypeStruct((2, rows, _LANE), jnp.float32),
            in_specs=[vmem_spec],
            out_specs=vmem_spec,
        )(raw)

        # undo the slab layout and recombine into complex64 (plain-JAX glue)
        real = scaled[0].reshape(-1)[:total].reshape(shape)
        imag = scaled[1].reshape(-1)[:total].reshape(shape)
        # cached once — forward() returns this, matching the PyTorch Parameter
        # TODO(synk): if the grid must be trainable, make `weights` the leaf
        #             parameter instead of re-deriving from raw samples.
        self.weights = jax.lax.complex(real, imag)

    def forward(self):
        # PyTorch forward just returns the stored grid; no per-call compute.
        return self.weights

    __call__ = forward


# -----------------------------------------------------------------------------
# Main
# -----------------------------------------------------------------------------
if __name__ == "__main__":
    cfg = VoxelCfg()
    key = jax.random.PRNGKey(0)

    model = VoxelPallas(cfg, key)
    weights = model()
    weights = jax.block_until_ready(weights)

    # sanity checks against the reference semantics
    assert weights.shape == (cfg.Nx, cfg.Ny, cfg.N_layers, cfg.N_freq)
    assert weights.dtype == jnp.complex64

    expected_real = model._real_raw * (cfg.real_max_eps - cfg.real_min_eps) + cfg.real_min_eps
    expected_imag = model._imag_raw * (cfg.imag_max_eps - cfg.imag_min_eps) + cfg.imag_min_eps
    assert jnp.allclose(jnp.real(weights), expected_real, rtol=1e-6, atol=1e-6)
    assert jnp.allclose(jnp.imag(weights), expected_imag, rtol=1e-6, atol=1e-6)

    # forward() is now a cached return — calling it again touches no kernel
    weights2 = jax.block_until_ready(model())
    assert weights2 is weights

    print("KERNEL_OK")
</pallas_src>

<mosaic_0001>
module attributes {stable_mosaic.version = 11 : i64} {
  func.func @voxel_kernel(%arg0: memref<2x32x128xf32, #tpu.memory_space<vmem>>, %arg1: memref<2x32x128xf32, #tpu.memory_space<vmem>>) attributes {dimension_semantics = [], scalar_prefetch = 0 : i64, scratch_operands = 0 : i64, tpu.core_type = #tpu.core_type<tc>} {
    %c0 = arith.constant 0 : index
    %c0_0 = arith.constant 0 : index
    %c0_1 = arith.constant 0 : index
    %0 = vector.load %arg0[%c0, %c0_0, %c0_1] : memref<2x32x128xf32, #tpu.memory_space<vmem>>, vector<1x32x128xf32>
    %1 = vector.shape_cast %0 : vector<1x32x128xf32> to vector<32x128xf32>
    %cst = arith.constant 1.900000e+01 : f32
    %2 = vector.broadcast %cst : f32 to vector<32x128xf32>
    %3 = arith.mulf %1, %2 : vector<32x128xf32>
    %cst_2 = arith.constant 1.000000e+00 : f32
    %4 = vector.broadcast %cst_2 : f32 to vector<32x128xf32>
    %5 = arith.addf %3, %4 : vector<32x128xf32>
    %c0_3 = arith.constant 0 : index
    %c0_4 = arith.constant 0 : index
    %c0_5 = arith.constant 0 : index
    %6 = vector.load %arg1[%c0_3, %c0_4, %c0_5] : memref<2x32x128xf32, #tpu.memory_space<vmem>>, vector<1x32x128xf32>
    %7 = vector.shape_cast %6 : vector<1x32x128xf32> to vector<32x128xf32>
    %8 = vector.shape_cast %5 : vector<32x128xf32> to vector<1x32x128xf32>
    tpu.vector_store %arg1[%c0_3, %c0_4, %c0_5], %8 {strides = array<i32>} : memref<2x32x128xf32, #tpu.memory_space<vmem>>, vector<1x32x128xf32>,
    %c1 = arith.constant 1 : index
    %c0_6 = arith.constant 0 : index
    %c0_7 = arith.constant 0 : index
    %9 = vector.load %arg0[%c1, %c0_6, %c0_7] : memref<2x32x128xf32, #tpu.memory_space<vmem>>, vector<1x32x128xf32>
    %10 = vector.shape_cast %9 : vector<1x32x128xf32> to vector<32x128xf32>
    %cst_8 = arith.constant 1.000000e+00 : f32
    %11 = vector.broadcast %cst_8 : f32 to vector<32x128xf32>
    %12 = arith.mulf %10, %11 : vector<32x128xf32>
    %cst_9 = arith.constant 0.000000e+00 : f32
    %13 = vector.broadcast %cst_9 : f32 to vector<32x128xf32>
    %14 = arith.addf %12, %13 : vector<32x128xf32>
    %c1_10 = arith.constant 1 : index
    %c0_11 = arith.constant 0 : index
    %c0_12 = arith.constant 0 : index
    %15 = vector.load %arg1[%c1_10, %c0_11, %c0_12] : memref<2x32x128xf32, #tpu.memory_space<vmem>>, vector<1x32x128xf32>
    %16 = vector.shape_cast %15 : vector<1x32x128xf32> to vector<32x128xf32>
    %17 = vector.shape_cast %14 : vector<32x128xf32> to vector<1x32x128xf32>
    tpu.vector_store %arg1[%c1_10, %c0_11, %c0_12], %17 {strides = array<i32>} : memref<2x32x128xf32, #tpu.memory_space<vmem>>, vector<1x32x128xf32>,
    return
  }
}

</mosaic_0001>

<llo_original>
// kernel: tpu_custom_call.1
$region0: #{tpu_custom_call.1}
  #allocation0 [shape = 'u32[]', space=smem, size = 0x4, offset = 0x4, fixed_abs, tag = 'smem constant byte address 0x4 - core index']
  #allocation1 [shape = 'u32[144,128]{1,0:T(1,128)}', space=vmem, size = 0x12000, scoped, tag = 'internal scratch']
  %s0 = inlined_call_operand.hbm [shape: f32[2,32,128], index: 0, kind: input, shape index: {}]
  %s1 = inlined_call_operand.hbm [shape: f32[2,32,128], index: 1, kind: output, shape index: {}]
  %s2 = sld [smem:[#allocation0]]
  $region18: #{tpu_custom_call.1} parent=0
    _
  %s4 = ssub.s32 1, %s2
  %s5 = scalar_select 0, %s4, %s2
  $region1: #{tpu_custom_call.1} parent=0
    #allocation2 [shape = 'u8[32768]{0}', space=vmem, size = 0x8000, scoped, tag = 'input window, operand 0, single buffered']
    #allocation3 [shape = 's32[1]{0}', space=sflag, size = 0x4, scoped, tag = 'scoped memory for tpu_custom_call.1']
    #allocation4 [shape = 's32[1]{0}', space=sflag, size = 0x4, scoped, tag = 'scoped memory for tpu_custom_call.1']
    #allocation5 [shape = 'u8[32768]{0}', space=vmem, size = 0x8000, scoped, tag = 'output window, operand 0, single buffered']
    %6 = vsyncpa [#allocation3], 0
    %7 = vsyncpa [#allocation4], 0
    // Predicated region
    $region2: #{tpu_custom_call.1} parent=1 // pred_check
      _
    $region3: #{tpu_custom_call.1} parent=1 // pred_check_branch
      %9 = sbr.rel (0) target = $region5
    $region4: #{tpu_custom_call.1} parent=1 // pred_region
      %s11 = ssub.s32 1024, 1024
      %12 = vsyncadd [#allocation3], %s11
      %s13 = sshll.u32 [#allocation2], 4
      %s14 = int_to_ptr.vmem [resolvable:$true] %s13
      %19 = dma.hbm_to_vmem [thread:$0]  %s0, 1024, %s14, [#allocation3], 128, 128, 8
    $region5: #{tpu_custom_call.1} parent=1 // pred_fallthru
      _
    // Predicated region
    $region6: #{tpu_custom_call.1} parent=1 // pred_check
      _
    $region7: #{tpu_custom_call.1} parent=1 // pred_check_branch
      %21 = sbr.rel (0) target = $region9
    $region8: #{tpu_custom_call.1} parent=1 // pred_region
      %22 = dma.done [#allocation3], 1024
    $region9: #{tpu_custom_call.1} parent=1 // pred_fallthru
      _
    %v23 = vld [vmem:[#allocation2] sm:$0xff]
    %v24 = vld [vmem:[#allocation2 + $0x8] sm:$0xff]
    %v25 = vld [vmem:[#allocation2 + $0x10] sm:$0xff]
    %v26 = vld [vmem:[#allocation2 + $0x18] sm:$0xff]
    %v27 = vmul.f32 %v23, 19.0
    %v28 = vmul.f32 %v24, 19.0
    %v29 = vmul.f32 %v25, 19.0
    %v30 = vmul.f32 %v26, 19.0
    %v31 = vadd.f32 %v27, 1.0
    %v32 = vadd.f32 %v28, 1.0
    %v33 = vadd.f32 %v29, 1.0
    %v34 = vadd.f32 %v30, 1.0
    %35 = vst [vmem:[#allocation5] sm:$0xff] %v31
    %36 = vst [vmem:[#allocation5 + $0x8] sm:$0xff] %v32
    %37 = vst [vmem:[#allocation5 + $0x10] sm:$0xff] %v33
    %38 = vst [vmem:[#allocation5 + $0x18] sm:$0xff] %v34
    %s39 = scalar_lea.vmem [#allocation2], 32
    %v40 = vld [vmem:[%s39] sm:$0xff]
    %v41 = vld [vmem:[%s39 + $0x8] sm:$0xff]
    %v42 = vld [vmem:[%s39 + $0x10] sm:$0xff]
    %v43 = vld [vmem:[%s39 + $0x18] sm:$0xff]
    %v44 = vadd.f32 %v40, 0.0
    %v45 = vadd.f32 %v41, 0.0
    %v46 = vadd.f32 %v42, 0.0
    %v47 = vadd.f32 %v43, 0.0
    %s48 = scalar_lea.vmem [#allocation5], 32
    %49 = vst [vmem:[%s48] sm:$0xff] %v44
    %50 = vst [vmem:[%s48 + $0x8] sm:$0xff] %v45
    %51 = vst [vmem:[%s48 + $0x10] sm:$0xff] %v46
    %52 = vst [vmem:[%s48 + $0x18] sm:$0xff] %v47
    // Predicated region
    $region10: #{tpu_custom_call.1} parent=1 // pred_check
      _
    $region11: #{tpu_custom_call.1} parent=1 // pred_check_branch
      %54 = sbr.rel (0) target = $region13
    $region12: #{tpu_custom_call.1} parent=1 // pred_region
      %s56 = ssub.s32 1024, 1024
      %57 = vsyncadd [#allocation4], %s56
      %s58 = sshll.u32 [#allocation5], 4
      %s59 = int_to_ptr.vmem [resolvable:$true] %s58
      %64 = dma.vmem_to_hbm [thread:$0]  %s59, 1024, %s1, [#allocation4], 128, 128, 8
    $region13: #{tpu_custom_call.1} parent=1 // pred_fallthru
      _
    // Predicated region
    $region14: #{tpu_custom_call.1} parent=1 // pred_check
      _
    $region15: #{tpu_custom_call.1} parent=1 // pred_check_branch
      %66 = sbr.rel (0) target = $region17
    $region16: #{tpu_custom_call.1} parent=1 // pred_region
      %67 = dma.done [#allocation4], 1024
    $region17: #{tpu_custom_call.1} parent=1 // pred_fallthru
      _
    %68 = vsyncpa [#allocation3], 1
    %69 = vsyncpa [#allocation4], 1

</llo_original>
